<compile_context>
chip_gen: v5e
topology: v5e:2x2
jax: 0.10.0
libtpu: 0.0.40
codegen_flags: <defaults>
</compile_context>

<pallas_src>
import numpy as np
import jax
import jax.numpy as jnp
from jax.experimental import pallas as pl
from jax.experimental.pallas import tpu as pltpu


def _round_up(x, m):
    return ((x + m - 1) // m) * m


def qnetwork_kernel(x_ref, w1_ref, b1_ref, w2_ref, b2_ref, w3_ref, b3_ref, o_ref):
    # Layer 1: (TB, D)bf16 @ (D, H)bf16 -> f32 acc, + b1(f32), ReLU
    h1 = jnp.dot(x_ref[...], w1_ref[...], preferred_element_type=jnp.float32)
    h1 = jnp.maximum(h1 + b1_ref[...], 0.0)
    # Layer 2: (TB, H) @ (H, 128) -> f32 acc, + b2, ReLU (cols 32..127 are zero pad)
    h2 = jnp.dot(h1.astype(jnp.bfloat16), w2_ref[...],
                 preferred_element_type=jnp.float32)
    h2 = jnp.maximum(h2 + b2_ref[...], 0.0)
    # Layer 3: (TB, 128) @ (128, 128) -> f32 acc, + b3 (lane-dense, padded rows/cols = 0)
    out = jnp.dot(h2.astype(jnp.bfloat16), w3_ref[...],
                  preferred_element_type=jnp.float32)
    o_ref[...] = (out + b3_ref[...]).astype(o_ref.dtype)


def prepare_params(params, lane=128):
    """One-time: cast weights to bf16 and zero-pad the mid/action dims to 128.

    Call once and reuse the result across forward calls (hoists ~1 MiB of HBM
    read/modify/write and several XLA ops off the per-step path).
    """
    w1, b1, w2, b2, w3, b3 = params
    hidden = w1.shape[1]
    mid = w2.shape[1]
    act = w3.shape[1]
    mid_p = _round_up(max(mid, lane), lane)
    a_pad = _round_up(max(act, lane), lane)

    w2p = jnp.zeros((hidden, mid_p), jnp.float32).at[:, :mid].set(w2)
    b2p = jnp.zeros((1, mid_p), jnp.float32).at[:, :mid].set(b2)
    w3p = jnp.zeros((mid_p, a_pad), jnp.float32).at[:mid, :act].set(w3)
    b3p = jnp.zeros((1, a_pad), jnp.float32).at[:, :act].set(b3)

    weights = (
        w1.astype(jnp.bfloat16),          # (d_in, hidden) bf16
        b1.astype(jnp.float32),           # (1, hidden)    f32
        w2p.astype(jnp.bfloat16),         # (hidden, 128)  bf16
        b2p,                              # (1, 128)       f32
        w3p.astype(jnp.bfloat16),         # (128, 128)     bf16
        b3p,                              # (1, 128)       f32
    )
    return {"weights": weights, "action_size": int(act)}


def _choose_tb(batch):
    """Batch-tile rows: multiple of 16 (bf16 sublane packing), <=1024 rows
    (amortize per-step overhead), and >=2 tiles when batch > 32 so both v7x
    TensorCores get work."""
    b16 = _round_up(batch, 16)
    if b16 <= 32:
        return b16
    return min(1024, _round_up(b16 // 2, 16))


def qnetwork_forward(obs, prepared):
    """obs: (batch, *obs_size) float32. Returns (batch, action_size) float32."""
    w1b, b1, w2b, b2p, w3b, b3p = prepared["weights"]
    act = prepared["action_size"]

    batch = obs.shape[0]
    x = obs.reshape(batch, -1).astype(jnp.bfloat16)   # same glue as obs.view(B, -1)
    d_in = x.shape[1]
    assert d_in == w1b.shape[0], "flattened obs dim mismatch with w1"
    hidden = w1b.shape[1]
    mid_p = w2b.shape[1]
    a_pad = w3b.shape[1]

    tb = _choose_tb(batch)
    b_pad = _round_up(batch, tb)
    if b_pad != batch:                                # skip the copy when aligned
        x = jnp.pad(x, ((0, b_pad - batch), (0, 0)))

    grid = (b_pad // tb,)

    out = pl.pallas_call(
        qnetwork_kernel,
        out_shape=jax.ShapeDtypeStruct((b_pad, a_pad), jnp.float32),
        grid=grid,
        in_specs=[
            pl.BlockSpec((tb, d_in),     lambda i: (i, 0)),   # x: tiled over batch
            pl.BlockSpec((d_in, hidden), lambda i: (0, 0)),   # weights resident
            pl.BlockSpec((1, hidden),    lambda i: (0, 0)),
            pl.BlockSpec((hidden, mid_p), lambda i: (0, 0)),
            pl.BlockSpec((1, mid_p),     lambda i: (0, 0)),
            pl.BlockSpec((mid_p, a_pad), lambda i: (0, 0)),
            pl.BlockSpec((1, a_pad),     lambda i: (0, 0)),
        ],
        out_specs=pl.BlockSpec((tb, a_pad), lambda i: (i, 0)),
        compiler_params=pltpu.CompilerParams(
            dimension_semantics=("parallel",),   # shard batch tiles across TCs (v7x)
            vmem_limit_bytes=32 << 20,           # ~8 MiB used at tb=1024; <64 MiB v7x
        ),
    )(x, w1b, b1, w2b, b2p, w3b, b3p)

    return out[:batch, :act]


def init_params(key, obs_size, action_size, hidden_size=256):
    d_in = int(np.prod(obs_size))
    dims = [(d_in, hidden_size), (hidden_size, 32), (32, action_size)]
    keys = jax.random.split(key, 6)
    params = []
    for i, (fan_in, fan_out) in enumerate(dims):
        bound = 1.0 / np.sqrt(fan_in)  # PyTorch nn.Linear default init range
        w = jax.random.uniform(keys[2 * i], (fan_in, fan_out),
                               minval=-bound, maxval=bound, dtype=jnp.float32)
        b = jax.random.uniform(keys[2 * i + 1], (1, fan_out),
                               minval=-bound, maxval=bound, dtype=jnp.float32)
        params += [w, b]
    return tuple(params)


def reference_forward_f32(obs, params):
    """Pure f32 reference, semantically identical to the PyTorch module."""
    w1, b1, w2, b2, w3, b3 = params
    x = obs.reshape(obs.shape[0], -1)
    h1 = jnp.maximum(x @ w1 + b1, 0.0)
    h2 = jnp.maximum(h1 @ w2 + b2, 0.0)
    return h2 @ w3 + b3


def reference_forward_bf16(obs, params):
    """Reference with the same bf16-in / f32-accumulate scheme as the kernel."""
    w1, b1, w2, b2, w3, b3 = params
    x = obs.reshape(obs.shape[0], -1).astype(jnp.bfloat16)
    h1 = jnp.dot(x, w1.astype(jnp.bfloat16), preferred_element_type=jnp.float32)
    h1 = jnp.maximum(h1 + b1, 0.0)
    h2 = jnp.dot(h1.astype(jnp.bfloat16), w2.astype(jnp.bfloat16),
                 preferred_element_type=jnp.float32)
    h2 = jnp.maximum(h2 + b2, 0.0)
    out = jnp.dot(h2.astype(jnp.bfloat16), w3.astype(jnp.bfloat16),
                  preferred_element_type=jnp.float32)
    return out + b3


if __name__ == "__main__":
    obs_size = (4, 16, 16)   # image-like observation -> flattened to 1024
    action_size = 8

    key = jax.random.PRNGKey(0)
    k_obs, k_par, k_obs2 = jax.random.split(key, 3)
    params = init_params(k_par, obs_size, action_size, hidden_size=256)
    prepared = prepare_params(params)          # one-time weight cast / pad

    # --- small batch (single tile) ---
    batch = 2
    obs = jax.random.normal(k_obs, (batch,) + obs_size, dtype=jnp.float32)
    q = jax.block_until_ready(qnetwork_forward(obs, prepared))
    assert q.shape == (batch, action_size)

    q_bf = reference_forward_bf16(obs, params)
    np.testing.assert_allclose(np.asarray(q), np.asarray(q_bf), rtol=1e-3, atol=1e-3)
    q_f32 = reference_forward_f32(obs, params)
    np.testing.assert_allclose(np.asarray(q), np.asarray(q_f32), rtol=0.1, atol=0.1)

    # --- larger batch (exercises the multi-tile / padded path) ---
    batch2 = 48
    obs2 = jax.random.normal(k_obs2, (batch2,) + obs_size, dtype=jnp.float32)
    q2 = jax.block_until_ready(qnetwork_forward(obs2, prepared))
    assert q2.shape == (batch2, action_size)
    q2_bf = reference_forward_bf16(obs2, params)
    np.testing.assert_allclose(np.asarray(q2), np.asarray(q2_bf), rtol=1e-3, atol=1e-3)

    print("KERNEL_OK")
</pallas_src>

<mosaic_0001>
module attributes {stable_mosaic.version = 11 : i64} {
  func.func @qnetwork_kernel(%arg0: i32, %arg1: memref<16x1024xbf16, #tpu.memory_space<vmem>>, %arg2: memref<1024x256xbf16, #tpu.memory_space<vmem>>, %arg3: memref<1x256xf32, #tpu.memory_space<vmem>>, %arg4: memref<256x128xbf16, #tpu.memory_space<vmem>>, %arg5: memref<1x128xf32, #tpu.memory_space<vmem>>, %arg6: memref<128x128xbf16, #tpu.memory_space<vmem>>, %arg7: memref<1x128xf32, #tpu.memory_space<vmem>>, %arg8: memref<16x128xf32, #tpu.memory_space<vmem>>) attributes {dimension_semantics = [#tpu.dimension_semantics<parallel>], iteration_bounds = array<i64: 1>, scalar_prefetch = 0 : i64, scratch_operands = 0 : i64, tpu.core_type = #tpu.core_type<tc>, window_params = [{transform_indices = @transform_0, window_bounds = array<i64: 16, 1024>}, {pipeline_mode = #tpu.pipeline_mode<synchronous>, transform_indices = @transform_1, window_bounds = array<i64: 1024, 256>}, {pipeline_mode = #tpu.pipeline_mode<synchronous>, transform_indices = @transform_2, window_bounds = array<i64: 1, 256>}, {pipeline_mode = #tpu.pipeline_mode<synchronous>, transform_indices = @transform_3, window_bounds = array<i64: 256, 128>}, {pipeline_mode = #tpu.pipeline_mode<synchronous>, transform_indices = @transform_4, window_bounds = array<i64: 1, 128>}, {pipeline_mode = #tpu.pipeline_mode<synchronous>, transform_indices = @transform_5, window_bounds = array<i64: 128, 128>}, {pipeline_mode = #tpu.pipeline_mode<synchronous>, transform_indices = @transform_6, window_bounds = array<i64: 1, 128>}, {transform_indices = @transform_7, window_bounds = array<i64: 16, 128>}]} {
    %c0 = arith.constant 0 : index
    %c0_0 = arith.constant 0 : index
    %0 = vector.load %arg1[%c0, %c0_0] : memref<16x1024xbf16, #tpu.memory_space<vmem>>, vector<16x1024xbf16>
    %c0_1 = arith.constant 0 : index
    %c0_2 = arith.constant 0 : index
    %1 = vector.load %arg2[%c0_1, %c0_2] : memref<1024x256xbf16, #tpu.memory_space<vmem>>, vector<1024x256xbf16>
    %cst = arith.constant dense<0.000000e+00> : vector<16x256xf32>
    %2 = tpu.matmul %0, %1, %cst {dimension_numbers = #tpu.dot_dimension_numbers<[1], [0], [0], [1], [0, 0, 1, 1], [], []>} : vector<16x1024xbf16>, vector<1024x256xbf16>, vector<16x256xf32> -> vector<16x256xf32>
    %c0_3 = arith.constant 0 : index
    %c0_4 = arith.constant 0 : index
    %3 = vector.load %arg3[%c0_3, %c0_4] : memref<1x256xf32, #tpu.memory_space<vmem>>, vector<1x256xf32>
    %4 = vector.broadcast %3 : vector<1x256xf32> to vector<16x256xf32>
    %5 = arith.addf %2, %4 : vector<16x256xf32>
    %cst_5 = arith.constant 0.000000e+00 : f32
    %6 = vector.broadcast %cst_5 : f32 to vector<16x256xf32>
    %7 = arith.maximumf %5, %6 : vector<16x256xf32>
    %8 = arith.truncf %7 : vector<16x256xf32> to vector<16x256xbf16>
    %c0_6 = arith.constant 0 : index
    %c0_7 = arith.constant 0 : index
    %9 = vector.load %arg4[%c0_6, %c0_7] : memref<256x128xbf16, #tpu.memory_space<vmem>>, vector<256x128xbf16>
    %cst_8 = arith.constant dense<0.000000e+00> : vector<16x128xf32>
    %10 = tpu.matmul %8, %9, %cst_8 {dimension_numbers = #tpu.dot_dimension_numbers<[1], [0], [0], [1], [0, 0, 1, 1], [], []>} : vector<16x256xbf16>, vector<256x128xbf16>, vector<16x128xf32> -> vector<16x128xf32>
    %c0_9 = arith.constant 0 : index
    %c0_10 = arith.constant 0 : index
    %11 = vector.load %arg5[%c0_9, %c0_10] : memref<1x128xf32, #tpu.memory_space<vmem>>, vector<1x128xf32>
    %12 = vector.broadcast %11 : vector<1x128xf32> to vector<16x128xf32>
    %13 = arith.addf %10, %12 : vector<16x128xf32>
    %cst_11 = arith.constant 0.000000e+00 : f32
    %14 = vector.broadcast %cst_11 : f32 to vector<16x128xf32>
    %15 = arith.maximumf %13, %14 : vector<16x128xf32>
    %16 = arith.truncf %15 : vector<16x128xf32> to vector<16x128xbf16>
    %c0_12 = arith.constant 0 : index
    %c0_13 = arith.constant 0 : index
    %17 = vector.load %arg6[%c0_12, %c0_13] : memref<128x128xbf16, #tpu.memory_space<vmem>>, vector<128x128xbf16>
    %cst_14 = arith.constant dense<0.000000e+00> : vector<16x128xf32>
    %18 = tpu.matmul %16, %17, %cst_14 {dimension_numbers = #tpu.dot_dimension_numbers<[1], [0], [0], [1], [0, 0, 1, 1], [], []>} : vector<16x128xbf16>, vector<128x128xbf16>, vector<16x128xf32> -> vector<16x128xf32>
    %c0_15 = arith.constant 0 : index
    %c0_16 = arith.constant 0 : index
    %19 = vector.load %arg7[%c0_15, %c0_16] : memref<1x128xf32, #tpu.memory_space<vmem>>, vector<1x128xf32>
    %20 = vector.broadcast %19 : vector<1x128xf32> to vector<16x128xf32>
    %21 = arith.addf %18, %20 : vector<16x128xf32>
    %c0_17 = arith.constant 0 : index
    %c0_18 = arith.constant 0 : index
    %22 = vector.load %arg8[%c0_17, %c0_18] : memref<16x128xf32, #tpu.memory_space<vmem>>, vector<16x128xf32>
    tpu.vector_store %arg8[%c0_17, %c0_18], %21 {strides = array<i32>} : memref<16x128xf32, #tpu.memory_space<vmem>>, vector<16x128xf32>,
    return
  }
  func.func @transform_0(%arg0: i32) -> (i32, i32) {
    %c0_i32 = arith.constant 0 : i32
    %c0_i32_0 = arith.constant 0 : i32
    return %arg0, %c0_i32 : i32, i32
  }
  func.func @transform_1(%arg0: i32) -> (i32, i32) {
    %c0_i32 = arith.constant 0 : i32
    %c0_i32_0 = arith.constant 0 : i32
    %c0_i32_1 = arith.constant 0 : i32
    return %c0_i32, %c0_i32_0 : i32, i32
  }
  func.func @transform_2(%arg0: i32) -> (i32, i32) {
    %c0_i32 = arith.constant 0 : i32
    %c0_i32_0 = arith.constant 0 : i32
    %c0_i32_1 = arith.constant 0 : i32
    return %c0_i32, %c0_i32_0 : i32, i32
  }
  func.func @transform_3(%arg0: i32) -> (i32, i32) {
    %c0_i32 = arith.constant 0 : i32
    %c0_i32_0 = arith.constant 0 : i32
    %c0_i32_1 = arith.constant 0 : i32
    return %c0_i32, %c0_i32_0 : i32, i32
  }
  func.func @transform_4(%arg0: i32) -> (i32, i32) {
    %c0_i32 = arith.constant 0 : i32
    %c0_i32_0 = arith.constant 0 : i32
    %c0_i32_1 = arith.constant 0 : i32
    return %c0_i32, %c0_i32_0 : i32, i32
  }
  func.func @transform_5(%arg0: i32) -> (i32, i32) {
    %c0_i32 = arith.constant 0 : i32
    %c0_i32_0 = arith.constant 0 : i32
    %c0_i32_1 = arith.constant 0 : i32
    return %c0_i32, %c0_i32_0 : i32, i32
  }
  func.func @transform_6(%arg0: i32) -> (i32, i32) {
    %c0_i32 = arith.constant 0 : i32
    %c0_i32_0 = arith.constant 0 : i32
    %c0_i32_1 = arith.constant 0 : i32
    return %c0_i32, %c0_i32_0 : i32, i32
  }
  func.func @transform_7(%arg0: i32) -> (i32, i32) {
    %c0_i32 = arith.constant 0 : i32
    %c0_i32_0 = arith.constant 0 : i32
    return %arg0, %c0_i32 : i32, i32
  }
}

</mosaic_0001>

<llo_original>
// kernel: tpu_custom_call.1
$region0: #{tpu_custom_call.1}
  #allocation0 [shape = 'u32[]', space=smem, size = 0x4, offset = 0x4, fixed_abs, tag = 'smem constant byte address 0x4 - core index']
  #allocation1 [shape = 'u32[72,128]{1,0:T(1,128)}', space=vmem, size = 0x9000, scoped, tag = 'internal scratch']
  %s0 = inlined_call_operand.hbm [shape: bf16[16,1024], index: 0, kind: input, shape index: {}]
  %s1 = inlined_call_operand.hbm [shape: bf16[1024,256], index: 1, kind: input, shape index: {}]
  %s2 = inlined_call_operand.hbm [shape: f32[1,256], index: 2, kind: input, shape index: {}]
  %s3 = inlined_call_operand.hbm [shape: bf16[256,128], index: 3, kind: input, shape index: {}]
  %s4 = inlined_call_operand.vmem [shape: f32[1,128], index: 4, kind: input, shape index: {}]
  %s5 = inlined_call_operand.hbm [shape: bf16[128,128], index: 5, kind: input, shape index: {}]
  %s6 = inlined_call_operand.vmem [shape: f32[1,128], index: 6, kind: input, shape index: {}]
  %s7 = inlined_call_operand.hbm [shape: f32[16,128], index: 7, kind: output, shape index: {}]
  %s8 = sld [smem:[#allocation0]]
  $region58: #{tpu_custom_call.1} parent=0
    _
  %s10 = ssub.s32 1, %s8
  %s11 = scalar_select 0, %s10, %s8
  $region1: #{tpu_custom_call.1} parent=0
    #allocation2 [shape = 'u8[32768]{0}', space=vmem, size = 0x8000, scoped, tag = 'input window, operand 0, single buffered']
    #allocation3 [shape = 's32[1]{0}', space=sflag, size = 0x4, scoped, tag = 'scoped memory for tpu_custom_call.1']
    #allocation4 [shape = 's32[1]{0}', space=sflag, size = 0x4, scoped, tag = 'scoped memory for tpu_custom_call.1']
    #allocation5 [shape = 'u8[524288]{0}', space=vmem, size = 0x80000, scoped, tag = 'input window, operand 1, single buffered']
    #allocation6 [shape = 's32[1]{0}', space=sflag, size = 0x4, scoped, tag = 'scoped memory for tpu_custom_call.1']
    #allocation7 [shape = 'u8[1024]{0}', space=vmem, size = 0x400, scoped, tag = 'input window, operand 2, single buffered']
    #allocation8 [shape = 'u8[65536]{0}', space=vmem, size = 0x10000, scoped, tag = 'input window, operand 3, single buffered']
    #allocation9 [shape = 's32[1]{0}', space=sflag, size = 0x4, scoped, tag = 'scoped memory for tpu_custom_call.1']
    #allocation10 [shape = 'u8[32768]{0}', space=vmem, size = 0x8000, scoped, tag = 'input window, operand 5, single buffered']
    #allocation11 [shape = 'u8[8192]{0}', space=vmem, size = 0x2000, scoped, tag = 'output window, operand 0, single buffered']
    %12 = vsyncpa [#allocation3], 0
    %13 = vsyncpa [#allocation6], 0
    %14 = vsyncpa [#allocation9], 0
    %15 = vsyncpa [#allocation4], 0
    // Predicated region
    $region2: #{tpu_custom_call.1} parent=1 // pred_check
      _
    $region3: #{tpu_custom_call.1} parent=1 // pred_check_branch
      %17 = sbr.rel (0) target = $region5
    $region4: #{tpu_custom_call.1} parent=1 // pred_region
      %19 = vsyncadd [#allocation3], 0
      %s20 = sshll.u32 %s0, 4
      %s21 = int_to_ptr.hbm [resolvable:$true] %s20
      %s22 = sshll.u32 [#allocation2], 4
      %s23 = int_to_ptr.vmem [resolvable:$true] %s22
      %28 = dma.hbm_to_vmem [thread:$0]  %s21, 1024, %s23, [#allocation3], 512, 512, 32
    $region5: #{tpu_custom_call.1} parent=1 // pred_fallthru
      _
    // Predicated region
    $region6: #{tpu_custom_call.1} parent=1 // pred_check
      _
    $region7: #{tpu_custom_call.1} parent=1 // pred_check_branch
      %30 = sbr.rel (0) target = $region9
    $region8: #{tpu_custom_call.1} parent=1 // pred_region
      %32 = vsyncadd [#allocation6], 0
      %s33 = sshll.u32 %s1, 4
      %s34 = int_to_ptr.hbm [resolvable:$true] %s33
      %s35 = sshll.u32 [#allocation5], 4
      %s36 = int_to_ptr.vmem [resolvable:$true] %s35
      %41 = dma.hbm_to_vmem [thread:$0]  %s34, 16384, %s36, [#allocation6], 128, 128, 8
    $region9: #{tpu_custom_call.1} parent=1 // pred_fallthru
      _
    // Predicated region
    $region10: #{tpu_custom_call.1} parent=1 // pred_check
      _
    $region11: #{tpu_custom_call.1} parent=1 // pred_check_branch
      %43 = sbr.rel (0) target = $region13
    $region12: #{tpu_custom_call.1} parent=1 // pred_region
      %45 = vsyncadd [#allocation6], 0
      %s47 = sshll.u32 %s2, 4
      %s48 = int_to_ptr.hbm [resolvable:$true] %s47
      %s49 = sshll.u32 [#allocation7], 4
      %s50 = int_to_ptr.vmem [resolvable:$true] %s49
      %52 = dma.hbm_to_vmem [thread:$0]  %s48, 32, %s50, [#allocation6]
    $region13: #{tpu_custom_call.1} parent=1 // pred_fallthru
      _
    // Predicated region
    $region14: #{tpu_custom_call.1} parent=1 // pred_check
      _
    $region15: #{tpu_custom_call.1} parent=1 // pred_check_branch
      %54 = sbr.rel (0) target = $region17
    $region16: #{tpu_custom_call.1} parent=1 // pred_region
      %56 = vsyncadd [#allocation9], 0
      %s57 = sshll.u32 %s3, 4
      %s58 = int_to_ptr.hbm [resolvable:$true] %s57
      %s59 = sshll.u32 [#allocation8], 4
      %s60 = int_to_ptr.vmem [resolvable:$true] %s59
      %65 = dma.hbm_to_vmem [thread:$0]  %s58, 2048, %s60, [#allocation9], 64, 64, 4
    $region17: #{tpu_custom_call.1} parent=1 // pred_fallthru
      _
    // Predicated region
    $region18: #{tpu_custom_call.1} parent=1 // pred_check
      _
    $region19: #{tpu_custom_call.1} parent=1 // pred_check_branch
      %67 = sbr.rel (0) target = $region21
    $region20: #{tpu_custom_call.1} parent=1 // pred_region
      _
    $region21: #{tpu_custom_call.1} parent=1 // pred_fallthru
      _
    // Predicated region
    $region22: #{tpu_custom_call.1} parent=1 // pred_check
      _
    $region23: #{tpu_custom_call.1} parent=1 // pred_check_branch
      %69 = sbr.rel (0) target = $region25
    $region24: #{tpu_custom_call.1} parent=1 // pred_region
      %71 = vsyncadd [#allocation9], 0
      %s72 = sshll.u32 %s5, 4
      %s73 = int_to_ptr.hbm [resolvable:$true] %s72
      %s74 = sshll.u32 [#allocation10], 4
      %s75 = int_to_ptr.vmem [resolvable:$true] %s74
      %80 = dma.hbm_to_vmem [thread:$0]  %s73, 1024, %s75, [#allocation9], 64, 64, 4
    $region25: #{tpu_custom_call.1} parent=1 // pred_fallthru
      _
    // Predicated region
    $region26: #{tpu_custom_call.1} parent=1 // pred_check
      _
    $region27: #{tpu_custom_call.1} parent=1 // pred_check_branch
      %82 = sbr.rel (0) target = $region29
    $region28: #{tpu_custom_call.1} parent=1 // pred_region
      _
    $region29: #{tpu_custom_call.1} parent=1 // pred_fallthru
      _
    // Predicated region
    $region30: #{tpu_custom_call.1} parent=1 // pred_check
      _
    $region31: #{tpu_custom_call.1} parent=1 // pred_check_branch
      %84 = sbr.rel (0) target = $region33
    $region32: #{tpu_custom_call.1} parent=1 // pred_region
      %86 = dma.done [#allocation3], 1024
    $region33: #{tpu_custom_call.1} parent=1 // pred_fallthru
      _
    // Predicated region
    $region34: #{tpu_custom_call.1} parent=1 // pred_check
      _
    $region35: #{tpu_custom_call.1} parent=1 // pred_check_branch
      %88 = sbr.rel (0) target = $region37
    $region36: #{tpu_custom_call.1} parent=1 // pred_region
      %90 = dma.done [#allocation6], 16384
    $region37: #{tpu_custom_call.1} parent=1 // pred_fallthru
      _
    // Predicated region
    $region38: #{tpu_custom_call.1} parent=1 // pred_check
      _
    $region39: #{tpu_custom_call.1} parent=1 // pred_check_branch
      %92 = sbr.rel (0) target = $region41
    $region40: #{tpu_custom_call.1} parent=1 // pred_region
      %94 = dma.done [#allocation6], 32
    $region41: #{tpu_custom_call.1} parent=1 // pred_fallthru
      _
    // Predicated region
    $region42: #{tpu_custom_call.1} parent=1 // pred_check
      _
    $region43: #{tpu_custom_call.1} parent=1 // pred_check_branch
      %96 = sbr.rel (0) target = $region45
    $region44: #{tpu_custom_call.1} parent=1 // pred_region
      %98 = dma.done [#allocation9], 2048
    $region45: #{tpu_custom_call.1} parent=1 // pred_fallthru
      _
    // Predicated region
    $region46: #{tpu_custom_call.1} parent=1 // pred_check
      _
    $region47: #{tpu_custom_call.1} parent=1 // pred_check_branch
      %100 = sbr.rel (0) target = $region49
    $region48: #{tpu_custom_call.1} parent=1 // pred_region
      %102 = dma.done [#allocation9], 1024
    $region49: #{tpu_custom_call.1} parent=1 // pred_fallthru
      _
    %v103 = vld [vmem:[#allocation2] sm:$0xff]
    %v104 = vld [vmem:[#allocation2 + $0x8] sm:$0xff]
    %v105 = vld [vmem:[#allocation2 + $0x10] sm:$0xff]
    %v106 = vld [vmem:[#allocation2 + $0x18] sm:$0xff]
    %v107 = vld [vmem:[#allocation2 + $0x20] sm:$0xff]
    %v108 = vld [vmem:[#allocation2 + $0x28] sm:$0xff]
    %v109 = vld [vmem:[#allocation2 + $0x30] sm:$0xff]
    %v110 = vld [vmem:[#allocation2 + $0x38] sm:$0xff]
    %v111 = vld [vmem:[#allocation5] sm:$0xff]
    %v112 = vld [vmem:[#allocation5 + $0x8] sm:$0xff]
    %v113 = vld [vmem:[#allocation5 + $0x10] sm:$0xff]
    %v114 = vld [vmem:[#allocation5 + $0x18] sm:$0xff]
    %v115 = vld [vmem:[#allocation5 + $0x20] sm:$0xff]
    %v116 = vld [vmem:[#allocation5 + $0x28] sm:$0xff]
    %v117 = vld [vmem:[#allocation5 + $0x30] sm:$0xff]
    %v118 = vld [vmem:[#allocation5 + $0x38] sm:$0xff]
    %v119 = vld [vmem:[#allocation5 + $0x40] sm:$0xff]
    %v120 = vld [vmem:[#allocation5 + $0x48] sm:$0xff]
    %v121 = vld [vmem:[#allocation5 + $0x50] sm:$0xff]
    %v122 = vld [vmem:[#allocation5 + $0x58] sm:$0xff]
    %v123 = vld [vmem:[#allocation5 + $0x60] sm:$0xff]
    %v124 = vld [vmem:[#allocation5 + $0x68] sm:$0xff]
    %v125 = vld [vmem:[#allocation5 + $0x70] sm:$0xff]
    %v126 = vld [vmem:[#allocation5 + $0x78] sm:$0xff]
    %v127 = vld [vmem:[#allocation5 + $0x80] sm:$0xff]
    %v128 = vld [vmem:[#allocation5 + $0x88] sm:$0xff]
    %v129 = vld [vmem:[#allocation5 + $0x90] sm:$0xff]
    %v130 = vld [vmem:[#allocation5 + $0x98] sm:$0xff]
    %v131 = vld [vmem:[#allocation5 + $0xa0] sm:$0xff]
    %v132 = vld [vmem:[#allocation5 + $0xa8] sm:$0xff]
    %v133 = vld [vmem:[#allocation5 + $0xb0] sm:$0xff]
    %v134 = vld [vmem:[#allocation5 + $0xb8] sm:$0xff]
    %v135 = vld [vmem:[#allocation5 + $0xc0] sm:$0xff]
    %v136 = vld [vmem:[#allocation5 + $0xc8] sm:$0xff]
    %v137 = vld [vmem:[#allocation5 + $0xd0] sm:$0xff]
    %v138 = vld [vmem:[#allocation5 + $0xd8] sm:$0xff]
    %v139 = vld [vmem:[#allocation5 + $0xe0] sm:$0xff]
    %v140 = vld [vmem:[#allocation5 + $0xe8] sm:$0xff]
    %v141 = vld [vmem:[#allocation5 + $0xf0] sm:$0xff]
    %v142 = vld [vmem:[#allocation5 + $0xf8] sm:$0xff]
    %v143 = vld [vmem:[#allocation5 + $0x100] sm:$0xff]
    %v144 = vld [vmem:[#allocation5 + $0x108] sm:$0xff]
    %v145 = vld [vmem:[#allocation5 + $0x110] sm:$0xff]
    %v146 = vld [vmem:[#allocation5 + $0x118] sm:$0xff]
    %v147 = vld [vmem:[#allocation5 + $0x120] sm:$0xff]
    %v148 = vld [vmem:[#allocation5 + $0x128] sm:$0xff]
    %v149 = vld [vmem:[#allocation5 + $0x130] sm:$0xff]
    %v150 = vld [vmem:[#allocation5 + $0x138] sm:$0xff]
    %v151 = vld [vmem:[#allocation5 + $0x140] sm:$0xff]
    %v152 = vld [vmem:[#allocation5 + $0x148] sm:$0xff]
    %v153 = vld [vmem:[#allocation5 + $0x150] sm:$0xff]
    %v154 = vld [vmem:[#allocation5 + $0x158] sm:$0xff]
    %v155 = vld [vmem:[#allocation5 + $0x160] sm:$0xff]
    %v156 = vld [vmem:[#allocation5 + $0x168] sm:$0xff]
    %v157 = vld [vmem:[#allocation5 + $0x170] sm:$0xff]
    %v158 = vld [vmem:[#allocation5 + $0x178] sm:$0xff]
    %v159 = vld [vmem:[#allocation5 + $0x180] sm:$0xff]
    %v160 = vld [vmem:[#allocation5 + $0x188] sm:$0xff]
    %v161 = vld [vmem:[#allocation5 + $0x190] sm:$0xff]
    %v162 = vld [vmem:[#allocation5 + $0x198] sm:$0xff]
    %v163 = vld [vmem:[#allocation5 + $0x1a0] sm:$0xff]
    %v164 = vld [vmem:[#allocation5 + $0x1a8] sm:$0xff]
    %v165 = vld [vmem:[#allocation5 + $0x1b0] sm:$0xff]
    %v166 = vld [vmem:[#allocation5 + $0x1b8] sm:$0xff]
    %v167 = vld [vmem:[#allocation5 + $0x1c0] sm:$0xff]
    %v168 = vld [vmem:[#allocation5 + $0x1c8] sm:$0xff]
    %v169 = vld [vmem:[#allocation5 + $0x1d0] sm:$0xff]
    %v170 = vld [vmem:[#allocation5 + $0x1d8] sm:$0xff]
    %v171 = vld [vmem:[#allocation5 + $0x1e0] sm:$0xff]
    %v172 = vld [vmem:[#allocation5 + $0x1e8] sm:$0xff]
    %v173 = vld [vmem:[#allocation5 + $0x1f0] sm:$0xff]
    %v174 = vld [vmem:[#allocation5 + $0x1f8] sm:$0xff]
    %v175 = vld [vmem:[#allocation5 + $0x200] sm:$0xff]
    %v176 = vld [vmem:[#allocation5 + $0x208] sm:$0xff]
    %v177 = vld [vmem:[#allocation5 + $0x210] sm:$0xff]
    %v178 = vld [vmem:[#allocation5 + $0x218] sm:$0xff]
    %v179 = vld [vmem:[#allocation5 + $0x220] sm:$0xff]
    %v180 = vld [vmem:[#allocation5 + $0x228] sm:$0xff]
    %v181 = vld [vmem:[#allocation5 + $0x230] sm:$0xff]
    %v182 = vld [vmem:[#allocation5 + $0x238] sm:$0xff]
    %v183 = vld [vmem:[#allocation5 + $0x240] sm:$0xff]
    %v184 = vld [vmem:[#allocation5 + $0x248] sm:$0xff]
    %v185 = vld [vmem:[#allocation5 + $0x250] sm:$0xff]
    %v186 = vld [vmem:[#allocation5 + $0x258] sm:$0xff]
    %v187 = vld [vmem:[#allocation5 + $0x260] sm:$0xff]
    %v188 = vld [vmem:[#allocation5 + $0x268] sm:$0xff]
    %v189 = vld [vmem:[#allocation5 + $0x270] sm:$0xff]
    %v190 = vld [vmem:[#allocation5 + $0x278] sm:$0xff]
    %v191 = vld [vmem:[#allocation5 + $0x280] sm:$0xff]
    %v192 = vld [vmem:[#allocation5 + $0x288] sm:$0xff]
    %v193 = vld [vmem:[#allocation5 + $0x290] sm:$0xff]
    %v194 = vld [vmem:[#allocation5 + $0x298] sm:$0xff]
    %v195 = vld [vmem:[#allocation5 + $0x2a0] sm:$0xff]
    %v196 = vld [vmem:[#allocation5 + $0x2a8] sm:$0xff]
    %v197 = vld [vmem:[#allocation5 + $0x2b0] sm:$0xff]
    %v198 = vld [vmem:[#allocation5 + $0x2b8] sm:$0xff]
    %v199 = vld [vmem:[#allocation5 + $0x2c0] sm:$0xff]
    %v200 = vld [vmem:[#allocation5 + $0x2c8] sm:$0xff]
    %v201 = vld [vmem:[#allocation5 + $0x2d0] sm:$0xff]
    %v202 = vld [vmem:[#allocation5 + $0x2d8] sm:$0xff]
    %v203 = vld [vmem:[#allocation5 + $0x2e0] sm:$0xff]
    %v204 = vld [vmem:[#allocation5 + $0x2e8] sm:$0xff]
    %v205 = vld [vmem:[#allocation5 + $0x2f0] sm:$0xff]
    %v206 = vld [vmem:[#allocation5 + $0x2f8] sm:$0xff]
    %v207 = vld [vmem:[#allocation5 + $0x300] sm:$0xff]
    %v208 = vld [vmem:[#allocation5 + $0x308] sm:$0xff]
    %v209 = vld [vmem:[#allocation5 + $0x310] sm:$0xff]
    %v210 = vld [vmem:[#allocation5 + $0x318] sm:$0xff]
    %v211 = vld [vmem:[#allocation5 + $0x320] sm:$0xff]
    %v212 = vld [vmem:[#allocation5 + $0x328] sm:$0xff]
    %v213 = vld [vmem:[#allocation5 + $0x330] sm:$0xff]
    %v214 = vld [vmem:[#allocation5 + $0x338] sm:$0xff]
    %v215 = vld [vmem:[#allocation5 + $0x340] sm:$0xff]
    %v216 = vld [vmem:[#allocation5 + $0x348] sm:$0xff]
    %v217 = vld [vmem:[#allocation5 + $0x350] sm:$0xff]
    %v218 = vld [vmem:[#allocation5 + $0x358] sm:$0xff]
    %v219 = vld [vmem:[#allocation5 + $0x360] sm:$0xff]
    %v220 = vld [vmem:[#allocation5 + $0x368] sm:$0xff]
    %v221 = vld [vmem:[#allocation5 + $0x370] sm:$0xff]
    %v222 = vld [vmem:[#allocation5 + $0x378] sm:$0xff]
    %v223 = vld [vmem:[#allocation5 + $0x380] sm:$0xff]
    %v224 = vld [vmem:[#allocation5 + $0x388] sm:$0xff]
    %v225 = vld [vmem:[#allocation5 + $0x390] sm:$0xff]
    %v226 = vld [vmem:[#allocation5 + $0x398] sm:$0xff]
    %v227 = vld [vmem:[#allocation5 + $0x3a0] sm:$0xff]
    %v228 = vld [vmem:[#allocation5 + $0x3a8] sm:$0xff]
    %v229 = vld [vmem:[#allocation5 + $0x3b0] sm:$0xff]
    %v230 = vld [vmem:[#allocation5 + $0x3b8] sm:$0xff]
    %v231 = vld [vmem:[#allocation5 + $0x3c0] sm:$0xff]
    %v232 = vld [vmem:[#allocation5 + $0x3c8] sm:$0xff]
    %v233 = vld [vmem:[#allocation5 + $0x3d0] sm:$0xff]
    %v234 = vld [vmem:[#allocation5 + $0x3d8] sm:$0xff]
    %v235 = vld [vmem:[#allocation5 + $0x3e0] sm:$0xff]
    %v236 = vld [vmem:[#allocation5 + $0x3e8] sm:$0xff]
    %v237 = vld [vmem:[#allocation5 + $0x3f0] sm:$0xff]
    %v238 = vld [vmem:[#allocation5 + $0x3f8] sm:$0xff]
    %v239 = vld [vmem:[#allocation7] sm:$0x3]
    %v241 = vperm.slane %v239, 0
    %v242 = vperm.slane %v239, 1
    %v253 = vunpack.c.l.b16 %v103
    %v254 = vunpack.c.h.b16 %v103
    %v255 = vunpack.c.l.b16 %v104
    %v256 = vunpack.c.h.b16 %v104
    %v257 = vunpack.c.l.b16 %v105
    %v258 = vunpack.c.h.b16 %v105
    %v259 = vunpack.c.l.b16 %v106
    %v260 = vunpack.c.h.b16 %v106
    %v261 = vunpack.c.l.b16 %v107
    %v262 = vunpack.c.h.b16 %v107
    %v263 = vunpack.c.l.b16 %v108
    %v264 = vunpack.c.h.b16 %v108
    %v265 = vunpack.c.l.b16 %v109
    %v266 = vunpack.c.h.b16 %v109
    %v267 = vunpack.c.l.b16 %v110
    %v268 = vunpack.c.h.b16 %v110
    %v269 = vpack.c.b16 %v261, %v253
    %v270 = vpack.c.b16 %v262, %v254
    %v271 = vpack.c.b16 %v263, %v255
    %v272 = vpack.c.b16 %v264, %v256
    %v273 = vpack.c.b16 %v265, %v257
    %v274 = vpack.c.b16 %v266, %v258
    %v275 = vpack.c.b16 %v267, %v259
    %v276 = vpack.c.b16 %v268, %v260
    %v413 = vunpack.c.l.b16 %v111
    %v414 = vunpack.c.h.b16 %v111
    %v415 = vunpack.c.l.b16 %v112
    %v416 = vunpack.c.h.b16 %v112
    %v417 = vunpack.c.l.b16 %v113
    %v418 = vunpack.c.h.b16 %v113
    %v419 = vunpack.c.l.b16 %v114
    %v420 = vunpack.c.h.b16 %v114
    %v421 = vunpack.c.l.b16 %v115
    %v422 = vunpack.c.h.b16 %v115
    %v423 = vunpack.c.l.b16 %v116
    %v424 = vunpack.c.h.b16 %v116
    %v425 = vunpack.c.l.b16 %v117
    %v426 = vunpack.c.h.b16 %v117
    %v427 = vunpack.c.l.b16 %v118
    %v428 = vunpack.c.h.b16 %v118
    %v429 = vunpack.c.l.b16 %v119
    %v430 = vunpack.c.h.b16 %v119
    %v431 = vunpack.c.l.b16 %v120
    %v432 = vunpack.c.h.b16 %v120
    %v433 = vunpack.c.l.b16 %v121
    %v434 = vunpack.c.h.b16 %v121
    %v435 = vunpack.c.l.b16 %v122
    %v436 = vunpack.c.h.b16 %v122
    %v437 = vunpack.c.l.b16 %v123
    %v438 = vunpack.c.h.b16 %v123
    %v439 = vunpack.c.l.b16 %v124
    %v440 = vunpack.c.h.b16 %v124
    %v441 = vunpack.c.l.b16 %v125
    %v442 = vunpack.c.h.b16 %v125
    %v443 = vunpack.c.l.b16 %v126
    %v444 = vunpack.c.h.b16 %v126
    %v445 = vunpack.c.l.b16 %v127
    %v446 = vunpack.c.h.b16 %v127
    %v447 = vunpack.c.l.b16 %v128
    %v448 = vunpack.c.h.b16 %v128
    %v449 = vunpack.c.l.b16 %v129
    %v450 = vunpack.c.h.b16 %v129
    %v451 = vunpack.c.l.b16 %v130
    %v452 = vunpack.c.h.b16 %v130
    %v453 = vunpack.c.l.b16 %v131
    %v454 = vunpack.c.h.b16 %v131
    %v455 = vunpack.c.l.b16 %v132
    %v456 = vunpack.c.h.b16 %v132
    %v457 = vunpack.c.l.b16 %v133
    %v458 = vunpack.c.h.b16 %v133
    %v459 = vunpack.c.l.b16 %v134
    %v460 = vunpack.c.h.b16 %v134
    %v461 = vunpack.c.l.b16 %v135
    %v462 = vunpack.c.h.b16 %v135
    %v463 = vunpack.c.l.b16 %v136
    %v464 = vunpack.c.h.b16 %v136
    %v465 = vunpack.c.l.b16 %v137
    %v466 = vunpack.c.h.b16 %v137
    %v467 = vunpack.c.l.b16 %v138
    %v468 = vunpack.c.h.b16 %v138
    %v469 = vunpack.c.l.b16 %v139
    %v470 = vunpack.c.h.b16 %v139
    %v471 = vunpack.c.l.b16 %v140
    %v472 = vunpack.c.h.b16 %v140
    %v473 = vunpack.c.l.b16 %v141
    %v474 = vunpack.c.h.b16 %v141
    %v475 = vunpack.c.l.b16 %v142
    %v476 = vunpack.c.h.b16 %v142
    %v477 = vunpack.c.l.b16 %v143
    %v478 = vunpack.c.h.b16 %v143
    %v479 = vunpack.c.l.b16 %v144
    %v480 = vunpack.c.h.b16 %v144
    %v481 = vunpack.c.l.b16 %v145
    %v482 = vunpack.c.h.b16 %v145
    %v483 = vunpack.c.l.b16 %v146
    %v484 = vunpack.c.h.b16 %v146
    %v485 = vunpack.c.l.b16 %v147
    %v486 = vunpack.c.h.b16 %v147
    %v487 = vunpack.c.l.b16 %v148
    %v488 = vunpack.c.h.b16 %v148
    %v489 = vunpack.c.l.b16 %v149
    %v490 = vunpack.c.h.b16 %v149
    %v491 = vunpack.c.l.b16 %v150
    %v492 = vunpack.c.h.b16 %v150
    %v493 = vunpack.c.l.b16 %v151
    %v494 = vunpack.c.h.b16 %v151
    %v495 = vunpack.c.l.b16 %v152
    %v496 = vunpack.c.h.b16 %v152
    %v497 = vunpack.c.l.b16 %v153
    %v498 = vunpack.c.h.b16 %v153
    %v499 = vunpack.c.l.b16 %v154
    %v500 = vunpack.c.h.b16 %v154
    %v501 = vunpack.c.l.b16 %v155
    %v502 = vunpack.c.h.b16 %v155
    %v503 = vunpack.c.l.b16 %v156
    %v504 = vunpack.c.h.b16 %v156
    %v505 = vunpack.c.l.b16 %v157
    %v506 = vunpack.c.h.b16 %v157
    %v507 = vunpack.c.l.b16 %v158
    %v508 = vunpack.c.h.b16 %v158
    %v509 = vunpack.c.l.b16 %v159
    %v510 = vunpack.c.h.b16 %v159
    %v511 = vunpack.c.l.b16 %v160
    %v512 = vunpack.c.h.b16 %v160
    %v513 = vunpack.c.l.b16 %v161
    %v514 = vunpack.c.h.b16 %v161
    %v515 = vunpack.c.l.b16 %v162
    %v516 = vunpack.c.h.b16 %v162
    %v517 = vunpack.c.l.b16 %v163
    %v518 = vunpack.c.h.b16 %v163
    %v519 = vunpack.c.l.b16 %v164
    %v520 = vunpack.c.h.b16 %v164
    %v521 = vunpack.c.l.b16 %v165
    %v522 = vunpack.c.h.b16 %v165
    %v523 = vunpack.c.l.b16 %v166
    %v524 = vunpack.c.h.b16 %v166
    %v525 = vunpack.c.l.b16 %v167
    %v526 = vunpack.c.h.b16 %v167
    %v527 = vunpack.c.l.b16 %v168
    %v528 = vunpack.c.h.b16 %v168
    %v529 = vunpack.c.l.b16 %v169
    %v530 = vunpack.c.h.b16 %v169
    %v531 = vunpack.c.l.b16 %v170
    %v532 = vunpack.c.h.b16 %v170
    %v533 = vunpack.c.l.b16 %v171
    %v534 = vunpack.c.h.b16 %v171
    %v535 = vunpack.c.l.b16 %v172
    %v536 = vunpack.c.h.b16 %v172
    %v537 = vunpack.c.l.b16 %v173
    %v538 = vunpack.c.h.b16 %v173
    %v539 = vunpack.c.l.b16 %v174
    %v540 = vunpack.c.h.b16 %v174
    %v541 = vunpack.c.l.b16 %v175
    %v542 = vunpack.c.h.b16 %v175
    %v543 = vunpack.c.l.b16 %v176
    %v544 = vunpack.c.h.b16 %v176
    %v545 = vunpack.c.l.b16 %v177
    %v546 = vunpack.c.h.b16 %v177
    %v547 = vunpack.c.l.b16 %v178
    %v548 = vunpack.c.h.b16 %v178
    %v549 = vunpack.c.l.b16 %v179
    %v550 = vunpack.c.h.b16 %v179
    %v551 = vunpack.c.l.b16 %v180
    %v552 = vunpack.c.h.b16 %v180
    %v553 = vunpack.c.l.b16 %v181
    %v554 = vunpack.c.h.b16 %v181
    %v555 = vunpack.c.l.b16 %v182
    %v556 = vunpack.c.h.b16 %v182
    %v557 = vunpack.c.l.b16 %v183
    %v558 = vunpack.c.h.b16 %v183
    %v559 = vunpack.c.l.b16 %v184
    %v560 = vunpack.c.h.b16 %v184
    %v561 = vunpack.c.l.b16 %v185
    %v562 = vunpack.c.h.b16 %v185
    %v563 = vunpack.c.l.b16 %v186
    %v564 = vunpack.c.h.b16 %v186
    %v565 = vunpack.c.l.b16 %v187
    %v566 = vunpack.c.h.b16 %v187
    %v567 = vunpack.c.l.b16 %v188
    %v568 = vunpack.c.h.b16 %v188
    %v569 = vunpack.c.l.b16 %v189
    %v570 = vunpack.c.h.b16 %v189
    %v571 = vunpack.c.l.b16 %v190
    %v572 = vunpack.c.h.b16 %v190
    %v573 = vunpack.c.l.b16 %v191
    %v574 = vunpack.c.h.b16 %v191
    %v575 = vunpack.c.l.b16 %v192
    %v576 = vunpack.c.h.b16 %v192
    %v577 = vunpack.c.l.b16 %v193
    %v578 = vunpack.c.h.b16 %v193
    %v579 = vunpack.c.l.b16 %v194
    %v580 = vunpack.c.h.b16 %v194
    %v581 = vunpack.c.l.b16 %v195
    %v582 = vunpack.c.h.b16 %v195
    %v583 = vunpack.c.l.b16 %v196
    %v584 = vunpack.c.h.b16 %v196
    %v585 = vunpack.c.l.b16 %v197
    %v586 = vunpack.c.h.b16 %v197
    %v587 = vunpack.c.l.b16 %v198
    %v588 = vunpack.c.h.b16 %v198
    %v589 = vunpack.c.l.b16 %v199
    %v590 = vunpack.c.h.b16 %v199
    %v591 = vunpack.c.l.b16 %v200
    %v592 = vunpack.c.h.b16 %v200
    %v593 = vunpack.c.l.b16 %v201
    %v594 = vunpack.c.h.b16 %v201
    %v595 = vunpack.c.l.b16 %v202
    %v596 = vunpack.c.h.b16 %v202
    %v597 = vunpack.c.l.b16 %v203
    %v598 = vunpack.c.h.b16 %v203
    %v599 = vunpack.c.l.b16 %v204
    %v600 = vunpack.c.h.b16 %v204
    %v601 = vunpack.c.l.b16 %v205
    %v602 = vunpack.c.h.b16 %v205
    %v603 = vunpack.c.l.b16 %v206
    %v604 = vunpack.c.h.b16 %v206
    %v605 = vunpack.c.l.b16 %v207
    %v606 = vunpack.c.h.b16 %v207
    %v607 = vunpack.c.l.b16 %v208
    %v608 = vunpack.c.h.b16 %v208
    %v609 = vunpack.c.l.b16 %v209
    %v610 = vunpack.c.h.b16 %v209
    %v611 = vunpack.c.l.b16 %v210
    %v612 = vunpack.c.h.b16 %v210
    %v613 = vunpack.c.l.b16 %v211
    %v614 = vunpack.c.h.b16 %v211
    %v615 = vunpack.c.l.b16 %v212
    %v616 = vunpack.c.h.b16 %v212
    %v617 = vunpack.c.l.b16 %v213
    %v618 = vunpack.c.h.b16 %v213
    %v619 = vunpack.c.l.b16 %v214
    %v620 = vunpack.c.h.b16 %v214
    %v621 = vunpack.c.l.b16 %v215
    %v622 = vunpack.c.h.b16 %v215
    %v623 = vunpack.c.l.b16 %v216
    %v624 = vunpack.c.h.b16 %v216
    %v625 = vunpack.c.l.b16 %v217
    %v626 = vunpack.c.h.b16 %v217
    %v627 = vunpack.c.l.b16 %v218
    %v628 = vunpack.c.h.b16 %v218
    %v629 = vunpack.c.l.b16 %v219
    %v630 = vunpack.c.h.b16 %v219
    %v631 = vunpack.c.l.b16 %v220
    %v632 = vunpack.c.h.b16 %v220
    %v633 = vunpack.c.l.b16 %v221
    %v634 = vunpack.c.h.b16 %v221
    %v635 = vunpack.c.l.b16 %v222
    %v636 = vunpack.c.h.b16 %v222
    %v637 = vunpack.c.l.b16 %v223
    %v638 = vunpack.c.h.b16 %v223
    %v639 = vunpack.c.l.b16 %v224
    %v640 = vunpack.c.h.b16 %v224
    %v641 = vunpack.c.l.b16 %v225
    %v642 = vunpack.c.h.b16 %v225
    %v643 = vunpack.c.l.b16 %v226
    %v644 = vunpack.c.h.b16 %v226
    %v645 = vunpack.c.l.b16 %v227
    %v646 = vunpack.c.h.b16 %v227
    %v647 = vunpack.c.l.b16 %v228
    %v648 = vunpack.c.h.b16 %v228
    %v649 = vunpack.c.l.b16 %v229
    %v650 = vunpack.c.h.b16 %v229
    %v651 = vunpack.c.l.b16 %v230
    %v652 = vunpack.c.h.b16 %v230
    %v653 = vunpack.c.l.b16 %v231
    %v654 = vunpack.c.h.b16 %v231
    %v655 = vunpack.c.l.b16 %v232
    %v656 = vunpack.c.h.b16 %v232
    %v657 = vunpack.c.l.b16 %v233
    %v658 = vunpack.c.h.b16 %v233
    %v659 = vunpack.c.l.b16 %v234
    %v660 = vunpack.c.h.b16 %v234
    %v661 = vunpack.c.l.b16 %v235
    %v662 = vunpack.c.h.b16 %v235
    %v663 = vunpack.c.l.b16 %v236
    %v664 = vunpack.c.h.b16 %v236
    %v665 = vunpack.c.l.b16 %v237
    %v666 = vunpack.c.h.b16 %v237
    %v667 = vunpack.c.l.b16 %v238
    %v668 = vunpack.c.h.b16 %v238
    %v669 = vpack.c.b16 %v415, %v413
    %v670 = vpack.c.b16 %v416, %v414
    %v671 = vpack.c.b16 %v419, %v417
    %v672 = vpack.c.b16 %v420, %v418
    %v673 = vpack.c.b16 %v423, %v421
    %v674 = vpack.c.b16 %v424, %v422
    %v675 = vpack.c.b16 %v427, %v425
    %v676 = vpack.c.b16 %v428, %v426
    %v677 = vpack.c.b16 %v431, %v429
    %v678 = vpack.c.b16 %v432, %v430
    %v679 = vpack.c.b16 %v435, %v433
    %v680 = vpack.c.b16 %v436, %v434
    %v681 = vpack.c.b16 %v439, %v437
    %v682 = vpack.c.b16 %v440, %v438
    %v683 = vpack.c.b16 %v443, %v441
    %v684 = vpack.c.b16 %v444, %v442
    %v685 = vpack.c.b16 %v447, %v445
    %v686 = vpack.c.b16 %v448, %v446
    %v687 = vpack.c.b16 %v451, %v449
    %v688 = vpack.c.b16 %v452, %v450
    %v689 = vpack.c.b16 %v455, %v453
    %v690 = vpack.c.b16 %v456, %v454
    %v691 = vpack.c.b16 %v459, %v457
    %v692 = vpack.c.b16 %v460, %v458
    %v693 = vpack.c.b16 %v463, %v461
    %v694 = vpack.c.b16 %v464, %v462
    %v695 = vpack.c.b16 %v467, %v465
    %v696 = vpack.c.b16 %v468, %v466
    %v697 = vpack.c.b16 %v471, %v469
    %v698 = vpack.c.b16 %v472, %v470
    %v699 = vpack.c.b16 %v475, %v473
    %v700 = vpack.c.b16 %v476, %v474
    %v701 = vpack.c.b16 %v479, %v477
    %v702 = vpack.c.b16 %v480, %v478
    %v703 = vpack.c.b16 %v483, %v481
    %v704 = vpack.c.b16 %v484, %v482
    %v705 = vpack.c.b16 %v487, %v485
    %v706 = vpack.c.b16 %v488, %v486
    %v707 = vpack.c.b16 %v491, %v489
    %v708 = vpack.c.b16 %v492, %v490
    %v709 = vpack.c.b16 %v495, %v493
    %v710 = vpack.c.b16 %v496, %v494
    %v711 = vpack.c.b16 %v499, %v497
    %v712 = vpack.c.b16 %v500, %v498
    %v713 = vpack.c.b16 %v503, %v501
    %v714 = vpack.c.b16 %v504, %v502
    %v715 = vpack.c.b16 %v507, %v505
    %v716 = vpack.c.b16 %v508, %v506
    %v717 = vpack.c.b16 %v511, %v509
    %v718 = vpack.c.b16 %v512, %v510
    %v719 = vpack.c.b16 %v515, %v513
    %v720 = vpack.c.b16 %v516, %v514
    %v721 = vpack.c.b16 %v519, %v517
    %v722 = vpack.c.b16 %v520, %v518
    %v723 = vpack.c.b16 %v523, %v521
    %v724 = vpack.c.b16 %v524, %v522
    %v725 = vpack.c.b16 %v527, %v525
    %v726 = vpack.c.b16 %v528, %v526
    %v727 = vpack.c.b16 %v531, %v529
    %v728 = vpack.c.b16 %v532, %v530
    %v729 = vpack.c.b16 %v535, %v533
    %v730 = vpack.c.b16 %v536, %v534
    %v731 = vpack.c.b16 %v539, %v537
    %v732 = vpack.c.b16 %v540, %v538
    %v733 = vpack.c.b16 %v543, %v541
    %v734 = vpack.c.b16 %v544, %v542
    %v735 = vpack.c.b16 %v547, %v545
    %v736 = vpack.c.b16 %v548, %v546
    %v737 = vpack.c.b16 %v551, %v549
    %v738 = vpack.c.b16 %v552, %v550
    %v739 = vpack.c.b16 %v555, %v553
    %v740 = vpack.c.b16 %v556, %v554
    %v741 = vpack.c.b16 %v559, %v557
    %v742 = vpack.c.b16 %v560, %v558
    %v743 = vpack.c.b16 %v563, %v561
    %v744 = vpack.c.b16 %v564, %v562
    %v745 = vpack.c.b16 %v567, %v565
    %v746 = vpack.c.b16 %v568, %v566
    %v747 = vpack.c.b16 %v571, %v569
    %v748 = vpack.c.b16 %v572, %v570
    %v749 = vpack.c.b16 %v575, %v573
    %v750 = vpack.c.b16 %v576, %v574
    %v751 = vpack.c.b16 %v579, %v577
    %v752 = vpack.c.b16 %v580, %v578
    %v753 = vpack.c.b16 %v583, %v581
    %v754 = vpack.c.b16 %v584, %v582
    %v755 = vpack.c.b16 %v587, %v585
    %v756 = vpack.c.b16 %v588, %v586
    %v757 = vpack.c.b16 %v591, %v589
    %v758 = vpack.c.b16 %v592, %v590
    %v759 = vpack.c.b16 %v595, %v593
    %v760 = vpack.c.b16 %v596, %v594
    %v761 = vpack.c.b16 %v599, %v597
    %v762 = vpack.c.b16 %v600, %v598
    %v763 = vpack.c.b16 %v603, %v601
    %v764 = vpack.c.b16 %v604, %v602
    %v765 = vpack.c.b16 %v607, %v605
    %v766 = vpack.c.b16 %v608, %v606
    %v767 = vpack.c.b16 %v611, %v609
    %v768 = vpack.c.b16 %v612, %v610
    %v769 = vpack.c.b16 %v615, %v613
    %v770 = vpack.c.b16 %v616, %v614
    %v771 = vpack.c.b16 %v619, %v617
    %v772 = vpack.c.b16 %v620, %v618
    %v773 = vpack.c.b16 %v623, %v621
    %v774 = vpack.c.b16 %v624, %v622
    %v775 = vpack.c.b16 %v627, %v625
    %v776 = vpack.c.b16 %v628, %v626
    %v777 = vpack.c.b16 %v631, %v629
    %v778 = vpack.c.b16 %v632, %v630
    %v779 = vpack.c.b16 %v635, %v633
    %v780 = vpack.c.b16 %v636, %v634
    %v781 = vpack.c.b16 %v639, %v637
    %v782 = vpack.c.b16 %v640, %v638
    %v783 = vpack.c.b16 %v643, %v641
    %v784 = vpack.c.b16 %v644, %v642
    %v785 = vpack.c.b16 %v647, %v645
    %v786 = vpack.c.b16 %v648, %v646
    %v787 = vpack.c.b16 %v651, %v649
    %v788 = vpack.c.b16 %v652, %v650
    %v789 = vpack.c.b16 %v655, %v653
    %v790 = vpack.c.b16 %v656, %v654
    %v791 = vpack.c.b16 %v659, %v657
    %v792 = vpack.c.b16 %v660, %v658
    %v793 = vpack.c.b16 %v663, %v661
    %v794 = vpack.c.b16 %v664, %v662
    %v795 = vpack.c.b16 %v667, %v665
    %v796 = vpack.c.b16 %v668, %v666
    %925 = vmatpush.bf16.msra.mxu0 %v683
    %926 = vmatpush.bf16.msra.mxu0 %v681
    %927 = vmatpush.bf16.msra.mxu0 %v679
    %928 = vmatpush.bf16.msra.mxu0 %v677
    %929 = vmatpush.bf16.msra.mxu0 %v675
    %930 = vmatpush.bf16.msra.mxu0 %v673
    %931 = vmatpush.bf16.msra.mxu0 %v671
    %932 = vmatpush.bf16.msra.mxu0 %v669
    %933 = vmatmul.bf16.gmra.mxu0 %v269
    %v934 = vpop.f32.mrf.mxu0
    %v935 = vadd.f32 %v241, %v934
    %v936 = vpop.f32.mrf.mxu0
    %v937 = vadd.f32 %v241, %v936
    %938 = vdwg.mxu0
    %939 = vmatpush.bf16.msra.mxu0 %v699
    %940 = vmatpush.bf16.msra.mxu0 %v697
    %941 = vmatpush.bf16.msra.mxu0 %v695
    %942 = vmatpush.bf16.msra.mxu0 %v693
    %943 = vmatpush.bf16.msra.mxu0 %v691
    %944 = vmatpush.bf16.msra.mxu0 %v689
    %945 = vmatpush.bf16.msra.mxu0 %v687
    %946 = vmatpush.bf16.msra.mxu0 %v685
    %947 = vmatmul.bf16.gmra.mxu0 %v270
    %v948 = vpop.f32.mrf.mxu0
    %v949 = vadd.f32 %v935, %v948
    %v950 = vpop.f32.mrf.mxu0
    %v951 = vadd.f32 %v937, %v950
    %952 = vdwg.mxu0
    %953 = vmatpush.bf16.msra.mxu0 %v715
    %954 = vmatpush.bf16.msra.mxu0 %v713
    %955 = vmatpush.bf16.msra.mxu0 %v711
    %956 = vmatpush.bf16.msra.mxu0 %v709
    %957 = vmatpush.bf16.msra.mxu0 %v707
    %958 = vmatpush.bf16.msra.mxu0 %v705
    %959 = vmatpush.bf16.msra.mxu0 %v703
    %960 = vmatpush.bf16.msra.mxu0 %v701
    %961 = vmatmul.bf16.gmra.mxu0 %v271
    %v962 = vpop.f32.mrf.mxu0
    %v963 = vadd.f32 %v949, %v962
    %v964 = vpop.f32.mrf.mxu0
    %v965 = vadd.f32 %v951, %v964
    %966 = vdwg.mxu0
    %967 = vmatpush.bf16.msra.mxu0 %v731
    %968 = vmatpush.bf16.msra.mxu0 %v729
    %969 = vmatpush.bf16.msra.mxu0 %v727
    %970 = vmatpush.bf16.msra.mxu0 %v725
    %971 = vmatpush.bf16.msra.mxu0 %v723
    %972 = vmatpush.bf16.msra.mxu0 %v721
    %973 = vmatpush.bf16.msra.mxu0 %v719
    %974 = vmatpush.bf16.msra.mxu0 %v717
    %975 = vmatmul.bf16.gmra.mxu0 %v272
    %v976 = vpop.f32.mrf.mxu0
    %v977 = vadd.f32 %v963, %v976
    %v978 = vpop.f32.mrf.mxu0
    %v979 = vadd.f32 %v965, %v978
    %980 = vdwg.mxu0
    %981 = vmatpush.bf16.msra.mxu0 %v747
    %982 = vmatpush.bf16.msra.mxu0 %v745
    %983 = vmatpush.bf16.msra.mxu0 %v743
    %984 = vmatpush.bf16.msra.mxu0 %v741
    %985 = vmatpush.bf16.msra.mxu0 %v739
    %986 = vmatpush.bf16.msra.mxu0 %v737
    %987 = vmatpush.bf16.msra.mxu0 %v735
    %988 = vmatpush.bf16.msra.mxu0 %v733
    %989 = vmatmul.bf16.gmra.mxu0 %v273
    %v990 = vpop.f32.mrf.mxu0
    %v991 = vadd.f32 %v977, %v990
    %v992 = vpop.f32.mrf.mxu0
    %v993 = vadd.f32 %v979, %v992
    %994 = vdwg.mxu0
    %995 = vmatpush.bf16.msra.mxu0 %v763
    %996 = vmatpush.bf16.msra.mxu0 %v761
    %997 = vmatpush.bf16.msra.mxu0 %v759
    %998 = vmatpush.bf16.msra.mxu0 %v757
    %999 = vmatpush.bf16.msra.mxu0 %v755
    %1000 = vmatpush.bf16.msra.mxu0 %v753
    %1001 = vmatpush.bf16.msra.mxu0 %v751
    %1002 = vmatpush.bf16.msra.mxu0 %v749
    %1003 = vmatmul.bf16.gmra.mxu0 %v274
    %v1004 = vpop.f32.mrf.mxu0
    %v1005 = vadd.f32 %v991, %v1004
    %v1006 = vpop.f32.mrf.mxu0
    %v1007 = vadd.f32 %v993, %v1006
    %1008 = vdwg.mxu0
    %1009 = vmatpush.bf16.msra.mxu0 %v779
    %1010 = vmatpush.bf16.msra.mxu0 %v777
    %1011 = vmatpush.bf16.msra.mxu0 %v775
    %1012 = vmatpush.bf16.msra.mxu0 %v773
    %1013 = vmatpush.bf16.msra.mxu0 %v771
    %1014 = vmatpush.bf16.msra.mxu0 %v769
    %1015 = vmatpush.bf16.msra.mxu0 %v767
    %1016 = vmatpush.bf16.msra.mxu0 %v765
    %1017 = vmatmul.bf16.gmra.mxu0 %v275
    %v1018 = vpop.f32.mrf.mxu0
    %v1019 = vadd.f32 %v1005, %v1018
    %v1020 = vpop.f32.mrf.mxu0
    %v1021 = vadd.f32 %v1007, %v1020
    %1022 = vdwg.mxu0
    %1023 = vmatpush.bf16.msra.mxu0 %v795
    %1024 = vmatpush.bf16.msra.mxu0 %v793
    %1025 = vmatpush.bf16.msra.mxu0 %v791
    %1026 = vmatpush.bf16.msra.mxu0 %v789
    %1027 = vmatpush.bf16.msra.mxu0 %v787
    %1028 = vmatpush.bf16.msra.mxu0 %v785
    %1029 = vmatpush.bf16.msra.mxu0 %v783
    %1030 = vmatpush.bf16.msra.mxu0 %v781
    %1031 = vmatmul.bf16.gmra.mxu0 %v276
    %v1032 = vpop.f32.mrf.mxu0
    %v1033 = vadd.f32 %v1019, %v1032
    %v1034 = vpop.f32.mrf.mxu0
    %v1035 = vadd.f32 %v1021, %v1034
    %1036 = vdwg.mxu0
    %1037 = vmatpush.bf16.msra.mxu0 %v684
    %1038 = vmatpush.bf16.msra.mxu0 %v682
    %1039 = vmatpush.bf16.msra.mxu0 %v680
    %1040 = vmatpush.bf16.msra.mxu0 %v678
    %1041 = vmatpush.bf16.msra.mxu0 %v676
    %1042 = vmatpush.bf16.msra.mxu0 %v674
    %1043 = vmatpush.bf16.msra.mxu0 %v672
    %1044 = vmatpush.bf16.msra.mxu0 %v670
    %1045 = vmatmul.bf16.gmra.mxu0 %v269
    %v1046 = vpop.f32.mrf.mxu0
    %v1047 = vadd.f32 %v242, %v1046
    %v1048 = vpop.f32.mrf.mxu0
    %v1049 = vadd.f32 %v242, %v1048
    %1050 = vdwg.mxu0
    %1051 = vmatpush.bf16.msra.mxu0 %v700
    %1052 = vmatpush.bf16.msra.mxu0 %v698
    %1053 = vmatpush.bf16.msra.mxu0 %v696
    %1054 = vmatpush.bf16.msra.mxu0 %v694
    %1055 = vmatpush.bf16.msra.mxu0 %v692
    %1056 = vmatpush.bf16.msra.mxu0 %v690
    %1057 = vmatpush.bf16.msra.mxu0 %v688
    %1058 = vmatpush.bf16.msra.mxu0 %v686
    %1059 = vmatmul.bf16.gmra.mxu0 %v270
    %v1060 = vpop.f32.mrf.mxu0
    %v1061 = vadd.f32 %v1047, %v1060
    %v1062 = vpop.f32.mrf.mxu0
    %v1063 = vadd.f32 %v1049, %v1062
    %1064 = vdwg.mxu0
    %1065 = vmatpush.bf16.msra.mxu0 %v716
    %1066 = vmatpush.bf16.msra.mxu0 %v714
    %1067 = vmatpush.bf16.msra.mxu0 %v712
    %1068 = vmatpush.bf16.msra.mxu0 %v710
    %1069 = vmatpush.bf16.msra.mxu0 %v708
    %1070 = vmatpush.bf16.msra.mxu0 %v706
    %1071 = vmatpush.bf16.msra.mxu0 %v704
    %1072 = vmatpush.bf16.msra.mxu0 %v702
    %1073 = vmatmul.bf16.gmra.mxu0 %v271
    %v1074 = vpop.f32.mrf.mxu0
    %v1075 = vadd.f32 %v1061, %v1074
    %v1076 = vpop.f32.mrf.mxu0
    %v1077 = vadd.f32 %v1063, %v1076
    %1078 = vdwg.mxu0
    %1079 = vmatpush.bf16.msra.mxu0 %v732
    %1080 = vmatpush.bf16.msra.mxu0 %v730
    %1081 = vmatpush.bf16.msra.mxu0 %v728
    %1082 = vmatpush.bf16.msra.mxu0 %v726
    %1083 = vmatpush.bf16.msra.mxu0 %v724
    %1084 = vmatpush.bf16.msra.mxu0 %v722
    %1085 = vmatpush.bf16.msra.mxu0 %v720
    %1086 = vmatpush.bf16.msra.mxu0 %v718
    %1087 = vmatmul.bf16.gmra.mxu0 %v272
    %v1088 = vpop.f32.mrf.mxu0
    %v1089 = vadd.f32 %v1075, %v1088
    %v1090 = vpop.f32.mrf.mxu0
    %v1091 = vadd.f32 %v1077, %v1090
    %1092 = vdwg.mxu0
    %1093 = vmatpush.bf16.msra.mxu0 %v748
    %1094 = vmatpush.bf16.msra.mxu0 %v746
    %1095 = vmatpush.bf16.msra.mxu0 %v744
    %1096 = vmatpush.bf16.msra.mxu0 %v742
    %1097 = vmatpush.bf16.msra.mxu0 %v740
    %1098 = vmatpush.bf16.msra.mxu0 %v738
    %1099 = vmatpush.bf16.msra.mxu0 %v736
    %1100 = vmatpush.bf16.msra.mxu0 %v734
    %1101 = vmatmul.bf16.gmra.mxu0 %v273
    %v1102 = vpop.f32.mrf.mxu0
    %v1103 = vadd.f32 %v1089, %v1102
    %v1104 = vpop.f32.mrf.mxu0
    %v1105 = vadd.f32 %v1091, %v1104
    %1106 = vdwg.mxu0
    %1107 = vmatpush.bf16.msra.mxu0 %v764
    %1108 = vmatpush.bf16.msra.mxu0 %v762
    %1109 = vmatpush.bf16.msra.mxu0 %v760
    %1110 = vmatpush.bf16.msra.mxu0 %v758
    %1111 = vmatpush.bf16.msra.mxu0 %v756
    %1112 = vmatpush.bf16.msra.mxu0 %v754
    %1113 = vmatpush.bf16.msra.mxu0 %v752
    %1114 = vmatpush.bf16.msra.mxu0 %v750
    %1115 = vmatmul.bf16.gmra.mxu0 %v274
    %v1116 = vpop.f32.mrf.mxu0
    %v1117 = vadd.f32 %v1103, %v1116
    %v1118 = vpop.f32.mrf.mxu0
    %v1119 = vadd.f32 %v1105, %v1118
    %1120 = vdwg.mxu0
    %1121 = vmatpush.bf16.msra.mxu0 %v780
    %1122 = vmatpush.bf16.msra.mxu0 %v778
    %1123 = vmatpush.bf16.msra.mxu0 %v776
    %1124 = vmatpush.bf16.msra.mxu0 %v774
    %1125 = vmatpush.bf16.msra.mxu0 %v772
    %1126 = vmatpush.bf16.msra.mxu0 %v770
    %1127 = vmatpush.bf16.msra.mxu0 %v768
    %1128 = vmatpush.bf16.msra.mxu0 %v766
    %1129 = vmatmul.bf16.gmra.mxu0 %v275
    %v1130 = vpop.f32.mrf.mxu0
    %v1131 = vadd.f32 %v1117, %v1130
    %v1132 = vpop.f32.mrf.mxu0
    %v1133 = vadd.f32 %v1119, %v1132
    %1134 = vdwg.mxu0
    %1135 = vmatpush.bf16.msra.mxu0 %v796
    %1136 = vmatpush.bf16.msra.mxu0 %v794
    %1137 = vmatpush.bf16.msra.mxu0 %v792
    %1138 = vmatpush.bf16.msra.mxu0 %v790
    %1139 = vmatpush.bf16.msra.mxu0 %v788
    %1140 = vmatpush.bf16.msra.mxu0 %v786
    %1141 = vmatpush.bf16.msra.mxu0 %v784
    %1142 = vmatpush.bf16.msra.mxu0 %v782
    %1143 = vmatmul.bf16.gmra.mxu0 %v276
    %v1144 = vpop.f32.mrf.mxu0
    %v1145 = vadd.f32 %v1131, %v1144
    %v1146 = vpop.f32.mrf.mxu0
    %v1147 = vadd.f32 %v1133, %v1146
    %1148 = vdwg.mxu0
    %v1149 = vmax.f32 %v1033, 0.0
    %v1150 = vmax.f32 %v1145, 0.0
    %v1151 = vmax.f32 %v1035, 0.0
    %v1152 = vmax.f32 %v1147, 0.0
    %v1153 = vpack.c.bf16 %v1151, %v1149
    %v1154 = vpack.c.bf16 %v1152, %v1150
    %v1155 = vld [vmem:[#allocation8] sm:$0xf]
    %v1156 = vld [vmem:[#allocation8 + $0x4] sm:$0xf]
    %v1157 = vld [vmem:[#allocation8 + $0x8] sm:$0xf]
    %v1158 = vld [vmem:[#allocation8 + $0xc] sm:$0xf]
    %v1159 = vld [vmem:[#allocation8 + $0x10] sm:$0xf]
    %v1160 = vld [vmem:[#allocation8 + $0x14] sm:$0xf]
    %v1161 = vld [vmem:[#allocation8 + $0x18] sm:$0xf]
    %v1162 = vld [vmem:[#allocation8 + $0x1c] sm:$0xf]
    %v1163 = vld [vmem:[#allocation8 + $0x20] sm:$0xf]
    %v1164 = vld [vmem:[#allocation8 + $0x24] sm:$0xf]
    %v1165 = vld [vmem:[#allocation8 + $0x28] sm:$0xf]
    %v1166 = vld [vmem:[#allocation8 + $0x2c] sm:$0xf]
    %v1167 = vld [vmem:[#allocation8 + $0x30] sm:$0xf]
    %v1168 = vld [vmem:[#allocation8 + $0x34] sm:$0xf]
    %v1169 = vld [vmem:[#allocation8 + $0x38] sm:$0xf]
    %v1170 = vld [vmem:[#allocation8 + $0x3c] sm:$0xf]
    %v1171 = vld [vmem:[#allocation8 + $0x40] sm:$0xf]
    %v1172 = vld [vmem:[#allocation8 + $0x44] sm:$0xf]
    %v1173 = vld [vmem:[#allocation8 + $0x48] sm:$0xf]
    %v1174 = vld [vmem:[#allocation8 + $0x4c] sm:$0xf]
    %v1175 = vld [vmem:[#allocation8 + $0x50] sm:$0xf]
    %v1176 = vld [vmem:[#allocation8 + $0x54] sm:$0xf]
    %v1177 = vld [vmem:[#allocation8 + $0x58] sm:$0xf]
    %v1178 = vld [vmem:[#allocation8 + $0x5c] sm:$0xf]
    %v1179 = vld [vmem:[#allocation8 + $0x60] sm:$0xf]
    %v1180 = vld [vmem:[#allocation8 + $0x64] sm:$0xf]
    %v1181 = vld [vmem:[#allocation8 + $0x68] sm:$0xf]
    %v1182 = vld [vmem:[#allocation8 + $0x6c] sm:$0xf]
    %v1183 = vld [vmem:[#allocation8 + $0x70] sm:$0xf]
    %v1184 = vld [vmem:[#allocation8 + $0x74] sm:$0xf]
    %v1185 = vld [vmem:[#allocation8 + $0x78] sm:$0xf]
    %v1186 = vld [vmem:[#allocation8 + $0x7c] sm:$0xf]
    %v1187 = vld [vmem:[%s4] sm:$0x1]
    %v1189 = vperm.slane %v1187, 0
    %v1223 = vunpack.c.l.b16 %v1155
    %v1224 = vunpack.c.l.b16 %v1156
    %v1225 = vunpack.c.l.b16 %v1157
    %v1226 = vunpack.c.l.b16 %v1158
    %v1227 = vunpack.c.l.b16 %v1159
    %v1228 = vunpack.c.l.b16 %v1160
    %v1229 = vunpack.c.l.b16 %v1161
    %v1230 = vunpack.c.l.b16 %v1162
    %v1231 = vunpack.c.l.b16 %v1163
    %v1232 = vunpack.c.l.b16 %v1164
    %v1233 = vunpack.c.l.b16 %v1165
    %v1234 = vunpack.c.l.b16 %v1166
    %v1235 = vunpack.c.l.b16 %v1167
    %v1236 = vunpack.c.l.b16 %v1168
    %v1237 = vunpack.c.l.b16 %v1169
    %v1238 = vunpack.c.l.b16 %v1170
    %v1239 = vunpack.c.l.b16 %v1171
    %v1240 = vunpack.c.l.b16 %v1172
    %v1241 = vunpack.c.l.b16 %v1173
    %v1242 = vunpack.c.l.b16 %v1174
    %v1243 = vunpack.c.l.b16 %v1175
    %v1244 = vunpack.c.l.b16 %v1176
    %v1245 = vunpack.c.l.b16 %v1177
    %v1246 = vunpack.c.l.b16 %v1178
    %v1247 = vunpack.c.l.b16 %v1179
    %v1248 = vunpack.c.l.b16 %v1180
    %v1249 = vunpack.c.l.b16 %v1181
    %v1250 = vunpack.c.l.b16 %v1182
    %v1251 = vunpack.c.l.b16 %v1183
    %v1252 = vunpack.c.l.b16 %v1184
    %v1253 = vunpack.c.l.b16 %v1185
    %v1254 = vunpack.c.l.b16 %v1186
    %v1255 = vpack.c.b16 %v1224, %v1223
    %v1256 = vpack.c.b16 %v1226, %v1225
    %v1257 = vpack.c.b16 %v1228, %v1227
    %v1258 = vpack.c.b16 %v1230, %v1229
    %v1259 = vpack.c.b16 %v1232, %v1231
    %v1260 = vpack.c.b16 %v1234, %v1233
    %v1261 = vpack.c.b16 %v1236, %v1235
    %v1262 = vpack.c.b16 %v1238, %v1237
    %v1263 = vpack.c.b16 %v1240, %v1239
    %v1264 = vpack.c.b16 %v1242, %v1241
    %v1265 = vpack.c.b16 %v1244, %v1243
    %v1266 = vpack.c.b16 %v1246, %v1245
    %v1267 = vpack.c.b16 %v1248, %v1247
    %v1268 = vpack.c.b16 %v1250, %v1249
    %v1269 = vpack.c.b16 %v1252, %v1251
    %v1270 = vpack.c.b16 %v1254, %v1253
    %1287 = vmatpush.bf16.msra.mxu0 %v1262
    %1288 = vmatpush.bf16.msra.mxu0 %v1261
    %1289 = vmatpush.bf16.msra.mxu0 %v1260
    %1290 = vmatpush.bf16.msra.mxu0 %v1259
    %1291 = vmatpush.bf16.msra.mxu0 %v1258
    %1292 = vmatpush.bf16.msra.mxu0 %v1257
    %1293 = vmatpush.bf16.msra.mxu0 %v1256
    %1294 = vmatpush.bf16.msra.mxu0 %v1255
    %1295 = vmatmul.bf16.gmra.mxu0 %v1153
    %v1296 = vpop.f32.mrf.mxu0
    %v1297 = vadd.f32 %v1189, %v1296
    %v1298 = vpop.f32.mrf.mxu0
    %v1299 = vadd.f32 %v1189, %v1298
    %1300 = vdwg.mxu0
    %1301 = vmatpush.bf16.msra.mxu0 %v1270
    %1302 = vmatpush.bf16.msra.mxu0 %v1269
    %1303 = vmatpush.bf16.msra.mxu0 %v1268
    %1304 = vmatpush.bf16.msra.mxu0 %v1267
    %1305 = vmatpush.bf16.msra.mxu0 %v1266
    %1306 = vmatpush.bf16.msra.mxu0 %v1265
    %1307 = vmatpush.bf16.msra.mxu0 %v1264
    %1308 = vmatpush.bf16.msra.mxu0 %v1263
    %1309 = vmatmul.bf16.gmra.mxu0 %v1154
    %v1310 = vpop.f32.mrf.mxu0
    %v1311 = vadd.f32 %v1297, %v1310
    %v1312 = vpop.f32.mrf.mxu0
    %v1313 = vadd.f32 %v1299, %v1312
    %1314 = vdwg.mxu0
    %v1315 = vmax.f32 %v1311, 0.0
    %v1316 = vmax.f32 %v1313, 0.0
    %v1317 = vpack.c.bf16 %v1316, %v1315
    %v1318 = vld [vmem:[#allocation10] sm:$0xf]
    %v1319 = vld [vmem:[#allocation10 + $0x4] sm:$0xf]
    %v1320 = vld [vmem:[#allocation10 + $0x8] sm:$0xf]
    %v1321 = vld [vmem:[#allocation10 + $0xc] sm:$0xf]
    %v1322 = vld [vmem:[#allocation10 + $0x10] sm:$0xf]
    %v1323 = vld [vmem:[#allocation10 + $0x14] sm:$0xf]
    %v1324 = vld [vmem:[#allocation10 + $0x18] sm:$0xf]
    %v1325 = vld [vmem:[#allocation10 + $0x1c] sm:$0xf]
    %v1326 = vld [vmem:[#allocation10 + $0x20] sm:$0xf]
    %v1327 = vld [vmem:[#allocation10 + $0x24] sm:$0xf]
    %v1328 = vld [vmem:[#allocation10 + $0x28] sm:$0xf]
    %v1329 = vld [vmem:[#allocation10 + $0x2c] sm:$0xf]
    %v1330 = vld [vmem:[#allocation10 + $0x30] sm:$0xf]
    %v1331 = vld [vmem:[#allocation10 + $0x34] sm:$0xf]
    %v1332 = vld [vmem:[#allocation10 + $0x38] sm:$0xf]
    %v1333 = vld [vmem:[#allocation10 + $0x3c] sm:$0xf]
    %v1334 = vld [vmem:[%s6] sm:$0x1]
    %v1336 = vperm.slane %v1334, 0
    %v1354 = vunpack.c.l.b16 %v1318
    %v1355 = vunpack.c.l.b16 %v1319
    %v1356 = vunpack.c.l.b16 %v1320
    %v1357 = vunpack.c.l.b16 %v1321
    %v1358 = vunpack.c.l.b16 %v1322
    %v1359 = vunpack.c.l.b16 %v1323
    %v1360 = vunpack.c.l.b16 %v1324
    %v1361 = vunpack.c.l.b16 %v1325
    %v1362 = vunpack.c.l.b16 %v1326
    %v1363 = vunpack.c.l.b16 %v1327
    %v1364 = vunpack.c.l.b16 %v1328
    %v1365 = vunpack.c.l.b16 %v1329
    %v1366 = vunpack.c.l.b16 %v1330
    %v1367 = vunpack.c.l.b16 %v1331
    %v1368 = vunpack.c.l.b16 %v1332
    %v1369 = vunpack.c.l.b16 %v1333
    %v1370 = vpack.c.b16 %v1355, %v1354
    %v1371 = vpack.c.b16 %v1357, %v1356
    %v1372 = vpack.c.b16 %v1359, %v1358
    %v1373 = vpack.c.b16 %v1361, %v1360
    %v1374 = vpack.c.b16 %v1363, %v1362
    %v1375 = vpack.c.b16 %v1365, %v1364
    %v1376 = vpack.c.b16 %v1367, %v1366
    %v1377 = vpack.c.b16 %v1369, %v1368
    %1386 = vmatpush.bf16.msra.mxu0 %v1377
    %1387 = vmatpush.bf16.msra.mxu0 %v1376
    %1388 = vmatpush.bf16.msra.mxu0 %v1375
    %1389 = vmatpush.bf16.msra.mxu0 %v1374
    %1390 = vmatpush.bf16.msra.mxu0 %v1373
    %1391 = vmatpush.bf16.msra.mxu0 %v1372
    %1392 = vmatpush.bf16.msra.mxu0 %v1371
    %1393 = vmatpush.bf16.msra.mxu0 %v1370
    %1394 = vmatmul.bf16.gmra.mxu0 %v1317
    %v1395 = vpop.f32.mrf.mxu0
    %v1396 = vadd.f32 %v1336, %v1395
    %v1397 = vpop.f32.mrf.mxu0
    %v1398 = vadd.f32 %v1336, %v1397
    %1399 = vdwg.mxu0
    %1400 = vst [vmem:[#allocation11] sm:$0xff] %v1396
    %1401 = vst [vmem:[#allocation11 + $0x8] sm:$0xff] %v1398
    // Predicated region
    $region50: #{tpu_custom_call.1} parent=1 // pred_check
      _
    $region51: #{tpu_custom_call.1} parent=1 // pred_check_branch
      %1403 = sbr.rel (0) target = $region53
    $region52: #{tpu_custom_call.1} parent=1 // pred_region
      %1405 = vsyncadd [#allocation4], 0
      %s1406 = sshll.u32 [#allocation11], 4
      %s1407 = int_to_ptr.vmem [resolvable:$true] %s1406
      %s1408 = sshll.u32 %s7, 4
      %s1409 = int_to_ptr.hbm [resolvable:$true] %s1408
      %1414 = dma.vmem_to_hbm [thread:$0]  %s1407, 256, %s1409, [#allocation4], 128, 128, 8
    $region53: #{tpu_custom_call.1} parent=1 // pred_fallthru
      _
    // Predicated region
    $region54: #{tpu_custom_call.1} parent=1 // pred_check
      _
    $region55: #{tpu_custom_call.1} parent=1 // pred_check_branch
      %1416 = sbr.rel (0) target = $region57
    $region56: #{tpu_custom_call.1} parent=1 // pred_region
      %1418 = dma.done [#allocation4], 256
    $region57: #{tpu_custom_call.1} parent=1 // pred_fallthru
      _
    %1419 = vsyncpa [#allocation3], 1
    %1420 = vsyncpa [#allocation6], 1
    %1421 = vsyncpa [#allocation9], 1
    %1422 = vsyncpa [#allocation4], 1

</llo_original>
